<compile_context>
chip_gen: v6e
topology: v6e:2x2x1
jax: 0.10.0
libtpu: 0.0.40
codegen_flags: <defaults>
</compile_context>

<pallas_src>
import functools

import jax
import jax.numpy as jnp
from jax.experimental import pallas as pl
from jax.experimental.pallas import tpu as pltpu

EPS = 1e-5  # nn.BatchNorm2d default eps


def _round_up(x, m):
    return (x + m - 1) // m * m


# ---------- Fused single-tile path: conv + BN (batch stats) + ReLU in one kernel ----------
def _fused_conv_bn_relu_kernel(w_ref, p_ref, g_ref, b_ref, o_ref, *, m_true):
    # w_ref: (Cout, K)   p_ref: (K, M_pad)   g/b: (Cout, 1)   o_ref: (Cout, M_pad)
    # Padded columns of p_ref are zero => they contribute nothing to sum / sum_sq,
    # and we divide by the true M, so batch statistics are exact.
    y = jnp.dot(w_ref[...], p_ref[...], preferred_element_type=jnp.float32)
    s = jnp.sum(y, axis=1, keepdims=True)              # (Cout, 1)  cross-lane -> XLU
    ss = jnp.sum(y * y, axis=1, keepdims=True)         # (Cout, 1)
    mean = s * (1.0 / m_true)
    var = jnp.maximum(ss * (1.0 / m_true) - mean * mean, 0.0)   # biased batch var
    inv_std = jax.lax.rsqrt(var + EPS)                 # EUP
    scale = g_ref[...] * inv_std
    shift = b_ref[...] - mean * scale
    o_ref[...] = jnp.maximum(y * scale + shift, 0.0)


# ---------- Pass 1 (multi-tile): conv matmul + per-tile BN partial sums ----------
def _conv_stats_kernel(w_ref, p_ref, y_ref, stats_ref):
    # w_ref:     (Cout, K)         resident weights (f32 or bf16)
    # p_ref:     (K, M_TILE)       transposed im2col tile (lane dim = M_TILE, 128-aligned)
    # y_ref:     (Cout, M_TILE)    f32 pre-BN conv output tile
    # stats_ref: (1, Cout, 2)      per-tile [sum, sum_of_squares] over the M_TILE lanes
    y = jnp.dot(w_ref[...], p_ref[...], preferred_element_type=jnp.float32)
    y_ref[...] = y
    stats_ref[0, :, 0:1] = jnp.sum(y, axis=1, keepdims=True)
    stats_ref[0, :, 1:2] = jnp.sum(y * y, axis=1, keepdims=True)


# ---------- Pass 2 (multi-tile): y * scale + shift, ReLU — in place over the same tiling ----------
def _bn_relu_kernel(scale_ref, shift_ref, y_ref, o_ref):
    # scale/shift: (Cout, 1) residents; y/o: (Cout, M_TILE)
    o_ref[...] = jnp.maximum(y_ref[...] * scale_ref[...] + shift_ref[...], 0.0)


def ms_stem1_pallas(x_nchw, conv_w, gamma, beta, *, m_tile=512,
                    matmul_dtype=jnp.float32):
    """x_nchw: (N, Cin, H, W); conv_w: (Cout, Cin, 3, 3); gamma/beta: (Cout,).

    matmul_dtype=jnp.bfloat16 is the recommended fast path on v6e/v7x (halves patch
    DMA bytes); BN statistics and normalization always run in float32.
    """
    N, Cin, H, W = x_nchw.shape
    Cout = conv_w.shape[0]
    Ho = (H + 2 * 1 - 3) // 2 + 1
    Wo = (W + 2 * 1 - 3) // 2 + 1
    M = N * Ho * Wo
    K = 9 * Cin

    # ---- glue: NCHW -> NHWC, pad, transposed im2col patches_T[k, m] ----
    #   k = (kh, kw, cin)  (tap-major, matching the weight reshape below)
    #   m = (n, ho, wo)
    x = jnp.transpose(x_nchw, (0, 2, 3, 1)).astype(jnp.float32)       # (N,H,W,Cin)
    xp = jnp.pad(x, ((0, 0), (1, 1), (1, 1), (0, 0)))
    taps = []
    for kh in range(3):
        for kw in range(3):
            t = xp[:, kh:kh + 2 * Ho:2, kw:kw + 2 * Wo:2, :]          # (N,Ho,Wo,Cin)
            taps.append(jnp.transpose(t, (3, 0, 1, 2)).reshape(Cin, M))
    patches_t = jnp.concatenate(taps, axis=0)                          # (K, M)

    # Tile M (lane axis) in 128-aligned tiles; zero-pad M so it divides evenly.
    mt = min(m_tile, _round_up(M, 128))
    m_pad = _round_up(M, mt)
    n_tiles = m_pad // mt
    if m_pad != M:
        patches_t = jnp.pad(patches_t, ((0, 0), (0, m_pad - M)))

    # weight (Cout, Cin, kh, kw) -> (Cout, kh, kw, Cin) -> (Cout, K)
    w_t = jnp.transpose(conv_w.astype(jnp.float32), (0, 2, 3, 1)).reshape(Cout, K)

    patches_t = patches_t.astype(matmul_dtype)
    w_t = w_t.astype(matmul_dtype)

    g32 = gamma.astype(jnp.float32)
    b32 = beta.astype(jnp.float32)

    vmem_limit = 32 * 1024 * 1024  # tiles are tiny vs 64 MiB (v7x) / 128 MiB (v5e/v6e)

    if n_tiles == 1:
        # ---- fused single-tile path: one HBM write, no intermediate y buffer ----
        out_t = pl.pallas_call(
            functools.partial(_fused_conv_bn_relu_kernel, m_true=M),
            out_shape=jax.ShapeDtypeStruct((Cout, m_pad), jnp.float32),
            compiler_params=pltpu.CompilerParams(vmem_limit_bytes=vmem_limit),
        )(w_t, patches_t, g32.reshape(Cout, 1), b32.reshape(Cout, 1))
        out_t = out_t[:, :M]
        return jnp.transpose(out_t.reshape(Cout, N, Ho, Wo), (1, 0, 2, 3))

    cparams = pltpu.CompilerParams(
        dimension_semantics=("parallel",),          # shards tiles across v7x's 2 TCs
        vmem_limit_bytes=vmem_limit,
    )

    # ---- pass 1: conv + per-tile BN partial sums ----
    y_t, stats = pl.pallas_call(
        _conv_stats_kernel,
        grid=(n_tiles,),
        in_specs=[
            pl.BlockSpec((Cout, K), lambda i: (0, 0)),      # weights: VMEM resident
            pl.BlockSpec((K, mt), lambda i: (0, i)),        # patch tile (lane-dense)
        ],
        out_specs=[
            pl.BlockSpec((Cout, mt), lambda i: (0, i)),     # y tile (lane-dense store)
            pl.BlockSpec((1, Cout, 2), lambda i: (i, 0, 0)),
        ],
        out_shape=[
            jax.ShapeDtypeStruct((Cout, m_pad), jnp.float32),
            jax.ShapeDtypeStruct((n_tiles, Cout, 2), jnp.float32),
        ],
        compiler_params=cparams,
    )(w_t, patches_t)

    # ---- tiny cross-tile reduction + BN finalize (Cout-sized, negligible) ----
    total_sum = jnp.sum(stats[:, :, 0], axis=0)                      # (Cout,)
    total_sumsq = jnp.sum(stats[:, :, 1], axis=0)                    # (Cout,)
    mean = total_sum / M
    var = jnp.maximum(total_sumsq / M - mean * mean, 0.0)            # biased batch var
    inv_std = jax.lax.rsqrt(var + EPS)
    scale = (g32 * inv_std).reshape(Cout, 1)
    shift = (b32 - mean * g32 * inv_std).reshape(Cout, 1)

    # ---- pass 2: normalize + ReLU, in place over the y buffer ----
    out_t = pl.pallas_call(
        _bn_relu_kernel,
        grid=(n_tiles,),
        in_specs=[
            pl.BlockSpec((Cout, 1), lambda i: (0, 0)),      # scale: resident
            pl.BlockSpec((Cout, 1), lambda i: (0, 0)),      # shift: resident
            pl.BlockSpec((Cout, mt), lambda i: (0, i)),     # y tile
        ],
        out_specs=pl.BlockSpec((Cout, mt), lambda i: (0, i)),
        out_shape=jax.ShapeDtypeStruct((Cout, m_pad), jnp.float32),
        input_output_aliases={2: 0},                        # reuse the y buffer in place
        compiler_params=cparams,
    )(scale, shift, y_t)

    # ---- glue: (Cout, M) -> (N, Cout, Ho, Wo) ----
    out_t = out_t[:, :M]
    return jnp.transpose(out_t.reshape(Cout, N, Ho, Wo), (1, 0, 2, 3))


def ms_stem1_reference(x_nchw, conv_w, gamma, beta):
    """Pure-JAX reference matching the PyTorch train-mode forward."""
    y = jax.lax.conv_general_dilated(
        x_nchw.astype(jnp.float32), conv_w.astype(jnp.float32),
        window_strides=(2, 2), padding=((1, 1), (1, 1)),
        dimension_numbers=("NCHW", "OIHW", "NCHW"))
    mean = jnp.mean(y, axis=(0, 2, 3), keepdims=True)
    var = jnp.mean((y - mean) ** 2, axis=(0, 2, 3), keepdims=True)
    y = (y - mean) * jax.lax.rsqrt(var + EPS)
    y = y * gamma.reshape(1, -1, 1, 1) + beta.reshape(1, -1, 1, 1)
    return jnp.maximum(y, 0.0)


if __name__ == "__main__":
    key = jax.random.PRNGKey(0)
    k_x, k_w, k_g, k_b = jax.random.split(key, 4)

    N, Cin, H, W = 2, 4, 16, 16
    Cout = Cin * 2

    x = jax.random.normal(k_x, (N, Cin, H, W), dtype=jnp.float32)
    conv_w = jax.random.normal(k_w, (Cout, Cin, 3, 3), dtype=jnp.float32) * 0.1
    gamma = 1.0 + 0.1 * jax.random.normal(k_g, (Cout,), dtype=jnp.float32)
    beta = 0.1 * jax.random.normal(k_b, (Cout,), dtype=jnp.float32)

    fwd = jax.jit(ms_stem1_pallas)

    # 1) main check: f32 fused single-tile path (M = 128)
    out = jax.block_until_ready(fwd(x, conv_w, gamma, beta))
    ref = jax.block_until_ready(ms_stem1_reference(x, conv_w, gamma, beta))
    assert out.shape == (N, Cout, H // 2, W // 2), out.shape
    assert jnp.allclose(out, ref, atol=2e-4, rtol=2e-4), float(jnp.max(jnp.abs(out - ref)))

    # 2) multi-tile grid (M = 2048 -> 4 tiles of 512): exercises the two-pass BN-stats path
    x2 = jax.random.normal(k_x, (2, Cin, 64, 64), dtype=jnp.float32)
    out2 = jax.block_until_ready(fwd(x2, conv_w, gamma, beta))
    ref2 = ms_stem1_reference(x2, conv_w, gamma, beta)
    assert jnp.allclose(out2, ref2, atol=2e-4, rtol=2e-4), float(jnp.max(jnp.abs(out2 - ref2)))

    # 3) ragged M (M = 81 -> padded to 128), N = 1, odd spatial size (fused path)
    x3 = jax.random.normal(k_w, (1, Cin, 18, 18), dtype=jnp.float32)
    out3 = jax.block_until_ready(fwd(x3, conv_w, gamma, beta))
    ref3 = ms_stem1_reference(x3, conv_w, gamma, beta)
    assert jnp.allclose(out3, ref3, atol=2e-4, rtol=2e-4), float(jnp.max(jnp.abs(out3 - ref3)))

    # 4) bf16 MXU operands (v6e/v7x fast path) — loose tolerance, BN math still f32
    fwd_bf16 = jax.jit(functools.partial(ms_stem1_pallas, matmul_dtype=jnp.bfloat16))
    out4 = jax.block_until_ready(fwd_bf16(x, conv_w, gamma, beta))
    assert jnp.allclose(out4, ref, atol=1e-1, rtol=1e-1), float(jnp.max(jnp.abs(out4 - ref)))

    # 5) bf16 + multi-tile path
    out5 = jax.block_until_ready(fwd_bf16(x2, conv_w, gamma, beta))
    assert jnp.allclose(out5, ref2, atol=1e-1, rtol=1e-1), float(jnp.max(jnp.abs(out5 - ref2)))

    print("KERNEL_OK")
</pallas_src>

<mosaic_0001>
module attributes {stable_mosaic.version = 11 : i64} {
  func.func @_fused_conv_bn_relu_kernel(%arg0: memref<8x36xf32, #tpu.memory_space<vmem>>, %arg1: memref<36x128xf32, #tpu.memory_space<vmem>>, %arg2: memref<8x1xf32, #tpu.memory_space<vmem>>, %arg3: memref<8x1xf32, #tpu.memory_space<vmem>>, %arg4: memref<8x128xf32, #tpu.memory_space<vmem>>) attributes {dimension_semantics = [], scalar_prefetch = 0 : i64, scratch_operands = 0 : i64, tpu.core_type = #tpu.core_type<tc>} {
    %c0 = arith.constant 0 : index
    %c0_0 = arith.constant 0 : index
    %0 = vector.load %arg0[%c0, %c0_0] : memref<8x36xf32, #tpu.memory_space<vmem>>, vector<8x36xf32>
    %c0_1 = arith.constant 0 : index
    %c0_2 = arith.constant 0 : index
    %1 = vector.load %arg1[%c0_1, %c0_2] : memref<36x128xf32, #tpu.memory_space<vmem>>, vector<36x128xf32>
    %cst = arith.constant dense<0.000000e+00> : vector<8x128xf32>
    %2 = tpu.matmul %0, %1, %cst {dimension_numbers = #tpu.dot_dimension_numbers<[1], [0], [0], [1], [0, 0, 1, 1], [], []>} : vector<8x36xf32>, vector<36x128xf32>, vector<8x128xf32> -> vector<8x128xf32>
    %cst_3 = arith.constant dense<0.000000e+00> : vector<8xf32>
    %3 = vector.multi_reduction <add>, %2, %cst_3 [1] : vector<8x128xf32> to vector<8xf32>
    %4 = vector.shape_cast %3 : vector<8xf32> to vector<8x1xf32>
    %5 = arith.mulf %2, %2 : vector<8x128xf32>
    %cst_4 = arith.constant dense<0.000000e+00> : vector<8xf32>
    %6 = vector.multi_reduction <add>, %5, %cst_4 [1] : vector<8x128xf32> to vector<8xf32>
    %7 = vector.shape_cast %6 : vector<8xf32> to vector<8x1xf32>
    %cst_5 = arith.constant 7.812500e-03 : f32
    %8 = vector.broadcast %cst_5 : f32 to vector<8x1xf32>
    %9 = arith.mulf %4, %8 : vector<8x1xf32>
    %cst_6 = arith.constant 7.812500e-03 : f32
    %10 = vector.broadcast %cst_6 : f32 to vector<8x1xf32>
    %11 = arith.mulf %7, %10 : vector<8x1xf32>
    %12 = arith.mulf %9, %9 : vector<8x1xf32>
    %13 = arith.subf %11, %12 : vector<8x1xf32>
    %cst_7 = arith.constant 0.000000e+00 : f32
    %14 = vector.broadcast %cst_7 : f32 to vector<8x1xf32>
    %15 = arith.maximumf %13, %14 : vector<8x1xf32>
    %cst_8 = arith.constant 9.99999974E-6 : f32
    %16 = vector.broadcast %cst_8 : f32 to vector<8x1xf32>
    %17 = arith.addf %15, %16 : vector<8x1xf32>
    %18 = math.rsqrt %17 : vector<8x1xf32>
    %c0_9 = arith.constant 0 : index
    %c0_10 = arith.constant 0 : index
    %19 = vector.load %arg2[%c0_9, %c0_10] : memref<8x1xf32, #tpu.memory_space<vmem>>, vector<8x1xf32>
    %20 = arith.mulf %19, %18 : vector<8x1xf32>
    %c0_11 = arith.constant 0 : index
    %c0_12 = arith.constant 0 : index
    %21 = vector.load %arg3[%c0_11, %c0_12] : memref<8x1xf32, #tpu.memory_space<vmem>>, vector<8x1xf32>
    %22 = arith.mulf %9, %20 : vector<8x1xf32>
    %23 = arith.subf %21, %22 : vector<8x1xf32>
    %24 = vector.broadcast %20 : vector<8x1xf32> to vector<8x128xf32>
    %25 = arith.mulf %2, %24 : vector<8x128xf32>
    %26 = vector.broadcast %23 : vector<8x1xf32> to vector<8x128xf32>
    %27 = arith.addf %25, %26 : vector<8x128xf32>
    %cst_13 = arith.constant 0.000000e+00 : f32
    %28 = vector.broadcast %cst_13 : f32 to vector<8x128xf32>
    %29 = arith.maximumf %27, %28 : vector<8x128xf32>
    %c0_14 = arith.constant 0 : index
    %c0_15 = arith.constant 0 : index
    %30 = vector.load %arg4[%c0_14, %c0_15] : memref<8x128xf32, #tpu.memory_space<vmem>>, vector<8x128xf32>
    tpu.vector_store %arg4[%c0_14, %c0_15], %29 {strides = array<i32>} : memref<8x128xf32, #tpu.memory_space<vmem>>, vector<8x128xf32>,
    return
  }
}

</mosaic_0001>

<llo_original>
// kernel: ms_stem1_pallas.1
$region0: #{ms_stem1_pallas.1}
  #allocation0 [shape = 'u32[]', space=smem, size = 0x4, offset = 0x4, fixed_abs, tag = 'smem constant byte address 0x4 - core index']
  #allocation1 [shape = 'u32[144,128]{1,0:T(1,128)}', space=vmem, size = 0x12000, scoped, tag = 'internal scratch']
  %s0 = inlined_call_operand.vmem [shape: f32[8,36], index: 0, kind: input, shape index: {}]
  %s1 = inlined_call_operand.vmem [shape: f32[36,128], index: 1, kind: input, shape index: {}]
  %s2 = inlined_call_operand.vmem [shape: f32[8,1], index: 2, kind: input, shape index: {}]
  %s3 = inlined_call_operand.vmem [shape: f32[8,1], index: 3, kind: input, shape index: {}]
  %s4 = inlined_call_operand.vmem [shape: f32[8,128], index: 4, kind: output, shape index: {}]
  %s5 = sld [smem:[#allocation0]]
  $region26: #{ms_stem1_pallas.1} parent=0
    _
  %s7 = ssub.s32 1, %s5
  %s8 = scalar_select 0, %s7, %s5
  // Predicated region
  $region2: #{ms_stem1_pallas.1} parent=0 // pred_check
    _
  $region3: #{ms_stem1_pallas.1} parent=0 // pred_check_branch
    %10 = sbr.rel (0) target = $region5
  $region4: #{ms_stem1_pallas.1} parent=0 // pred_region
    _
  $region5: #{ms_stem1_pallas.1} parent=0 // pred_fallthru
    _
  // Predicated region
  $region6: #{ms_stem1_pallas.1} parent=0 // pred_check
    _
  $region7: #{ms_stem1_pallas.1} parent=0 // pred_check_branch
    %12 = sbr.rel (0) target = $region9
  $region8: #{ms_stem1_pallas.1} parent=0 // pred_region
    _
  $region9: #{ms_stem1_pallas.1} parent=0 // pred_fallthru
    _
  // Predicated region
  $region10: #{ms_stem1_pallas.1} parent=0 // pred_check
    _
  $region11: #{ms_stem1_pallas.1} parent=0 // pred_check_branch
    %14 = sbr.rel (0) target = $region13
  $region12: #{ms_stem1_pallas.1} parent=0 // pred_region
    _
  $region13: #{ms_stem1_pallas.1} parent=0 // pred_fallthru
    _
  // Predicated region
  $region14: #{ms_stem1_pallas.1} parent=0 // pred_check
    _
  $region15: #{ms_stem1_pallas.1} parent=0 // pred_check_branch
    %16 = sbr.rel (0) target = $region17
  $region16: #{ms_stem1_pallas.1} parent=0 // pred_region
    _
  $region17: #{ms_stem1_pallas.1} parent=0 // pred_fallthru
    _
  %v17 = vld [vmem:[%s0] sm:$0xff]
  %v18 = vld [vmem:[%s1] sm:$0xff]
  %v19 = vld [vmem:[%s1 + $0x8] sm:$0xff]
  %v20 = vld [vmem:[%s1 + $0x10] sm:$0xff]
  %v21 = vld [vmem:[%s1 + $0x18] sm:$0xff]
  %v22 = vld [vmem:[%s1 + $0x20] sm:$0xf]
  %vm23 = vcmask 293888
  %v25 = vsel %vm23, %v17, 0
  %vm27 = vcmask 1043456
  %v29 = vsel %vm27, %v22, 0
  %31 = vmatprep.subr.mxu0 0.0
  %32 = vmatpush1.msra.mxu0 0.0
  %33 = vmatprep.subr.mxu0 0.0
  %34 = vmatpush1.msra.mxu0 0.0
  %35 = vmatprep.subr.mxu0 0.0
  %36 = vmatpush1.msra.mxu0 0.0
  %37 = vmatprep.subr.mxu0 0.0
  %38 = vmatpush1.msra.mxu0 0.0
  %39 = vmatprep.subr.mxu0 0.0
  %40 = vmatpush1.msra.mxu0 0.0
  %41 = vmatprep.subr.mxu0 0.0
  %42 = vmatpush1.msra.mxu0 0.0
  %43 = vmatprep.subr.mxu0 0.0
  %44 = vmatpush1.msra.mxu0 0.0
  %45 = vmatprep.subr.mxu0 0.0
  %46 = vmatpush1.msra.mxu0 0.0
  %47 = vmatprep.subr.mxu0 0.0
  %48 = vmatpush1.msra.mxu0 0.0
  %49 = vmatprep.subr.mxu0 0.0
  %50 = vmatpush1.msra.mxu0 0.0
  %51 = vmatprep.subr.mxu0 0.0
  %52 = vmatpush1.msra.mxu0 0.0
  %53 = vmatprep.subr.mxu0 0.0
  %54 = vmatpush1.msra.mxu0 %v29
  %55 = vmatprep.subr.mxu0 0.0
  %56 = vmatpush1.msra.mxu0 %v21
  %57 = vmatprep.subr.mxu0 0.0
  %58 = vmatpush1.msra.mxu0 %v20
  %59 = vmatprep.subr.mxu0 0.0
  %60 = vmatpush1.msra.mxu0 %v19
  %61 = vmatprep.subr.mxu0 0.0
  %62 = vmatpush1.msra.mxu0 %v18
  %63 = vmatprep.subr.mxu0 0.0
  %64 = vmatpush2.msra.mxu0 0.0
  %65 = vmatprep.subr.mxu0 0.0
  %66 = vmatpush2.msra.mxu0 0.0
  %67 = vmatprep.subr.mxu0 0.0
  %68 = vmatpush2.msra.mxu0 0.0
  %69 = vmatprep.subr.mxu0 0.0
  %70 = vmatpush2.msra.mxu0 0.0
  %71 = vmatprep.subr.mxu0 0.0
  %72 = vmatpush2.msra.mxu0 0.0
  %73 = vmatprep.subr.mxu0 0.0
  %74 = vmatpush2.msra.mxu0 0.0
  %75 = vmatprep.subr.mxu0 0.0
  %76 = vmatpush2.msra.mxu0 0.0
  %77 = vmatprep.subr.mxu0 0.0
  %78 = vmatpush2.msra.mxu0 0.0
  %79 = vmatprep.subr.mxu0 0.0
  %80 = vmatpush2.msra.mxu0 0.0
  %81 = vmatprep.subr.mxu0 0.0
  %82 = vmatpush2.msra.mxu0 0.0
  %83 = vmatprep.subr.mxu0 0.0
  %84 = vmatpush2.msra.mxu0 0.0
  %85 = vmatprep.subr.mxu0 0.0
  %86 = vmatpush2.msra.mxu0 0.0
  %87 = vmatprep.subr.mxu0 0.0
  %88 = vmatpush2.msra.mxu0 0.0
  %89 = vmatprep.subr.mxu0 0.0
  %90 = vmatpush2.msra.mxu0 0.0
  %91 = vmatprep.subr.mxu0 0.0
  %92 = vmatpush2.msra.mxu0 0.0
  %93 = vmatprep.subr.mxu0 0.0
  %94 = vmatpush2.msra.mxu0 0.0
  %95 = vmatprep.mubr.f32.mxu0 0.0
  %96 = vmatmul.mubr.f32.gmra.mxu0 %v25
  %v97 = vpop.f32.mrf.mxu0
  %v98 = vadd.f32 0.0, %v97
  %v99 = vpop.f32.mrf.mxu0
  %100 = vdwg.mxu0
  %101 = vadd.xlane.f32.xlu0 %v98
  %v102 = vpop.xlane.xlu0 %101
  %v103 = vmul.f32 %v98, %v98
  %104 = vadd.xlane.f32.xlu0 %v103
  %v105 = vpop.xlane.xlu0 %104
  %v106 = vmul.f32 %v102, 0.0078125
  %v107 = vmul.f32 %v105, 0.0078125
  %v108 = vmul.f32 %v106, %v106
  %v109 = vsub.f32 %v107, %v108
  %v110 = vmax.f32 %v109, 0.0
  %v111 = vadd.f32 %v110, 1e-05
  %v112 = vrsqrt.pop %v111
  %v113 = vld [vmem:[%s2] sm:$0xff]
  %v114 = vmul.f32 %v113, %v112
  %v115 = vld [vmem:[%s3] sm:$0xff]
  %v116 = vmul.f32 %v106, %v114
  %v117 = vsub.f32 %v115, %v116
  %119 = vset.pattern.permute.xlu0 0
  %120 = vperm.xlu0 %119, %v114
  %v121 = vpop.permute.xlu0 %120
  %v123 = vmul.f32 %v98, %v121
  %125 = vset.pattern.permute.xlu0 0
  %126 = vperm.xlu0 %125, %v117
  %v127 = vpop.permute.xlu0 %126
  %v129 = vadd.f32 %v123, %v127
  %v130 = vmax.f32 %v129, 0.0
  %131 = vst [vmem:[%s4] sm:$0xff] %v130
  // Predicated region
  $region18: #{ms_stem1_pallas.1} parent=0 // pred_check
    _
  $region19: #{ms_stem1_pallas.1} parent=0 // pred_check_branch
    %133 = sbr.rel (0) target = $region21
  $region20: #{ms_stem1_pallas.1} parent=0 // pred_region
    _
  $region21: #{ms_stem1_pallas.1} parent=0 // pred_fallthru
    _
  // Predicated region
  $region22: #{ms_stem1_pallas.1} parent=0 // pred_check
    _
  $region23: #{ms_stem1_pallas.1} parent=0 // pred_check_branch
    %135 = sbr.rel (0) target = $region25
  $region24: #{ms_stem1_pallas.1} parent=0 // pred_region
    _
  $region25: #{ms_stem1_pallas.1} parent=0 // pred_fallthru
    _

</llo_original>
